<compile_context>
chip_gen: v7x
topology: tpu7x:2x2x1
jax: 0.10.0
libtpu: 0.0.40
codegen_flags: <defaults>
</compile_context>

<pallas_src>
import math

import jax
import jax.numpy as jnp
from jax.experimental import pallas as pl
from jax.experimental.pallas import tpu as pltpu


def nf_tmvn_kernel(x_ref, params_ref, seg_ref, scal_ref, z_ref, lp_ref):
    """One batch tile: fused composed flow + structured-TMVN prior log-prob.

    x_ref      : (bm, L)       lane-dense packed samples (L = rpack*dim)
    params_ref : (3, L)        rows = [A, B, B - loc], each tiled to L lanes
    seg_ref    : (L, rpack)    0.5 * block-diagonal segment-sum matrix
    scal_ref   : (2,)  SMEM    [logz, beta]   beta = 2*s/(1+s*dim)
    z_ref      : (bm, L)       flow output (packed; reshaped in the wrapper)
    lp_ref     : (bm, rpack)   prior log-prob (packed; reshaped in the wrapper)
    """
    x = x_ref[...]                              # (bm, L) f32
    a = params_ref[0:1, :]                      # (1, L)  prod_k exp(s_k)
    b = params_ref[1:2, :]                      # (1, L)  composed shift
    c = params_ref[2:3, :]                      # (1, L)  composed shift - loc

    xa = x * a                                  # single fused flow application
    z_ref[...] = xa + b                         # full-width (lane-dense) store

    delta = xa + c                              # = z - loc (loc folded into c)
    seg = seg_ref[...]
    # Segmented per-sample row reductions via two tiny MXU matmuls (no XLU
    # relayout of a (bm,) reduce result).  seg carries a 0.5 factor, folding
    # the -0.5 of the log-prob into the matmul for free.
    h = jnp.dot(delta, seg, preferred_element_type=jnp.float32)          # 0.5*sum(d)
    q = jnp.dot(delta * delta, seg, preferred_element_type=jnp.float32)  # 0.5*sum(d^2)
    # Sherman-Morrison: quad = sum(d^2) - s/(1+s*dim) * sum(d)^2
    # lp = logz - 0.5*quad = (logz - q) + beta*h*h   with beta = 2*s/(1+s*dim)
    lp_ref[...] = (scal_ref[0] - q) + scal_ref[1] * (h * h)


def _vmem_limit_bytes():
    """Per-generation scoped VMEM limit (review: ~64-100 MiB on v5e/v6e with
    128 MiB physical VMEM, ~40-48 MiB on v7x with 64 MiB per TensorCore)."""
    cap = None
    try:
        info = pltpu.get_tpu_info()
        cap = int(getattr(info, "vmem_capacity_bytes", 0)) or None
    except Exception:
        cap = None
    if cap is None:
        cap = 64 << 20            # conservative: assume v7x-sized VMEM
    return max(32 << 20, min(int(cap * 0.7), 100 << 20))


def _choose_bm(m_rows, row_bytes, vmem_limit_bytes):
    """Batch-tile height in packed rows.

    Budget: x and z tiles are double-buffered by the BlockSpec pipeline
    -> 4*bm*row_bytes resident, plus tiny lp blocks / constants; keep that
    under ~half the scoped limit.  Prefer 512-2048-row tiles with >=2 grid
    steps (measured ~85% of HBM roofline); otherwise take the largest divisor
    that fits -- a single full-array tile is fine for small inputs because the
    grid is a sequential loop (~0.35us per step), so fewer/larger steps win.
    """
    cap = max(8, (vmem_limit_bytes // 2) // (4 * row_bytes))
    for cand in (2048, 1024, 512):
        if cand <= cap and m_rows % cand == 0 and m_rows // cand >= 2:
            return cand
    for cand in (8192, 4096, 2048, 1024, 512, 256, 128, 64, 32, 16, 8):
        if cand <= cap and m_rows % cand == 0:
            return cand
    return m_rows


def nf_tmvn_forward(x, log_s, shift, loc_offset, scale_offset, *, bm=None):
    """Wrapper: one-time parameter glue in JAX, hot path in the Pallas kernel."""
    m, dim = x.shape
    n_flows = log_s.shape[0]

    # __init__ semantics: loc = zeros(dim)+loc, cov = eye(dim)+scale (scalar s).
    loc = jnp.zeros((dim,), jnp.float32) + jnp.float32(loc_offset)
    s = jnp.float32(scale_offset)

    # cov = I + s*11^T  ->  Sherman-Morrison + matrix determinant lemma.
    # TODO(synk): for an arbitrary (trained) covariance matrix, fall back to a
    # Cholesky-factor matmul path tiled over a reduction grid axis.
    denom = 1.0 + s * dim
    logz = -0.5 * dim * math.log(2.0 * math.pi) - 0.5 * jnp.log(denom)
    beta = 2.0 * s / denom                      # folds the 0.5*quad scaling
    scal = jnp.stack([logz, beta]).astype(jnp.float32)     # (2,) -> SMEM

    # Compose the elementwise-affine flow chain into a single y = x*A + B.
    A = jnp.ones((dim,), jnp.float32)
    B = jnp.zeros((dim,), jnp.float32)
    for k in range(n_flows):
        e = jnp.exp(log_s[k])
        A = A * e
        B = B * e + shift[k]

    # log|det J| is data-independent for these flows: sum of all log-scales.
    log_det = jnp.full((m,), jnp.sum(log_s), jnp.float32)

    # Lane-dense repacking: for dim < 128 pack rpack samples per 128-lane row
    # so x loads and z stores are full-width, not masked to dim/128 lanes.
    rpack = 1
    if dim < 128 and 128 % dim == 0 and m % (128 // dim) == 0:
        rpack = 128 // dim
    L = rpack * dim
    m_p = m // rpack

    x2 = x.reshape(m_p, L)                                   # row-major, free
    a_t = jnp.tile(A, rpack)
    b_t = jnp.tile(B, rpack)
    loc_t = jnp.tile(loc, rpack)
    params = jnp.stack([a_t, b_t, b_t - loc_t], axis=0)      # (3, L)
    # 0.5 * block-diag ones: column g sums lanes [g*dim, (g+1)*dim).
    seg = 0.5 * jnp.kron(jnp.eye(rpack, dtype=jnp.float32),
                         jnp.ones((dim, 1), jnp.float32))    # (L, rpack)

    vmem_limit = _vmem_limit_bytes()
    bm = _choose_bm(m_p, L * 4, vmem_limit) if bm is None else bm
    grid = (m_p // bm,)

    # Constant-index inputs (params, seg) total < 8 KiB, so default
    # double-buffering is harmless; single-buffering (pl.Buffered(1)) is no
    # longer needed now that the (dim,dim) L^{-T} factor is eliminated.
    z2, lp2 = pl.pallas_call(
        nf_tmvn_kernel,
        out_shape=(
            jax.ShapeDtypeStruct((m_p, L), jnp.float32),
            jax.ShapeDtypeStruct((m_p, rpack), jnp.float32),
        ),
        grid=grid,
        in_specs=[
            pl.BlockSpec((bm, L), lambda i: (i, 0)),             # x (batch tile)
            pl.BlockSpec((3, L), lambda i: (0, 0)),              # composed A/B/C
            pl.BlockSpec((L, rpack), lambda i: (0, 0)),          # segment-sum mat
            pl.BlockSpec(memory_space=pltpu.MemorySpace.SMEM),   # [logz, beta]
        ],
        out_specs=(
            pl.BlockSpec((bm, L), lambda i: (i, 0)),
            pl.BlockSpec((bm, rpack), lambda i: (i, 0)),
        ),
        compiler_params=pltpu.CompilerParams(
            dimension_semantics=("parallel",),
            vmem_limit_bytes=vmem_limit),
    )(x2, params, seg, scal)

    # PyTorch returns 1-D (m,) tensors for prior_logprob and log_det.
    z = z2.reshape(m, dim)
    prior_logprob = lp2.reshape(m)
    return z, prior_logprob, log_det


if __name__ == "__main__":
    key = jax.random.PRNGKey(0)
    m, dim, n_flows = 512, 16, 3
    loc_offset, scale_offset = 0.5, 0.1

    k1, k2, k3 = jax.random.split(key, 3)
    x = jax.random.normal(k1, (m, dim), jnp.float32)
    log_s = 0.1 * jax.random.normal(k2, (n_flows, dim), jnp.float32)
    shift = 0.1 * jax.random.normal(k3, (n_flows, dim), jnp.float32)

    z, prior_logprob, log_det = nf_tmvn_forward(
        x, log_s, shift, loc_offset, scale_offset)
    jax.block_until_ready((z, prior_logprob, log_det))

    # Pure-JAX reference of forward() semantics (explicit inverse / slogdet).
    loc = jnp.zeros((dim,), jnp.float32) + loc_offset
    cov = jnp.eye(dim, dtype=jnp.float32) + scale_offset
    prec = jnp.linalg.inv(cov)
    _, logdet_cov = jnp.linalg.slogdet(cov)
    xr = x
    ldr = jnp.zeros((m,), jnp.float32)
    for k in range(n_flows):
        xr = xr * jnp.exp(log_s[k]) + shift[k]
        ldr = ldr + jnp.sum(log_s[k])
    delta = xr - loc
    lpr = (-0.5 * jnp.einsum("md,dk,mk->m", delta, prec, delta)
           - 0.5 * logdet_cov - 0.5 * dim * math.log(2.0 * math.pi))

    assert z.shape == (m, dim)
    assert prior_logprob.shape == (m,)
    assert log_det.shape == (m,)
    assert jnp.allclose(z, xr, atol=1e-5)
    assert jnp.allclose(log_det, ldr, atol=1e-5)
    assert jnp.allclose(prior_logprob, lpr, atol=2e-4)

    print("KERNEL_OK")
</pallas_src>

<mosaic_0001>
module attributes {stable_mosaic.version = 11 : i64} {
  func.func @nf_tmvn_kernel(%arg0: i32, %arg1: memref<64x128xf32, #tpu.memory_space<vmem>>, %arg2: memref<3x128xf32, #tpu.memory_space<vmem>>, %arg3: memref<128x8xf32, #tpu.memory_space<vmem>>, %arg4: memref<2xf32, #tpu.memory_space<smem>>, %arg5: memref<64x128xf32, #tpu.memory_space<vmem>>, %arg6: memref<64x8xf32, #tpu.memory_space<vmem>>) attributes {dimension_semantics = [#tpu.dimension_semantics<parallel>], iteration_bounds = array<i64: 1>, scalar_prefetch = 0 : i64, scratch_operands = 0 : i64, tpu.core_type = #tpu.core_type<tc>, window_params = [{transform_indices = @transform_0, window_bounds = array<i64: 64, 128>}, {pipeline_mode = #tpu.pipeline_mode<synchronous>, transform_indices = @transform_1, window_bounds = array<i64: 3, 128>}, {pipeline_mode = #tpu.pipeline_mode<synchronous>, transform_indices = @transform_2, window_bounds = array<i64: 128, 8>}, {transform_indices = @transform_3, window_bounds = array<i64: 2>}, {transform_indices = @transform_4, window_bounds = array<i64: 64, 128>}, {transform_indices = @transform_5, window_bounds = array<i64: 64, 8>}]} {
    %c0 = arith.constant 0 : index
    %c0_0 = arith.constant 0 : index
    %0 = vector.load %arg1[%c0, %c0_0] : memref<64x128xf32, #tpu.memory_space<vmem>>, vector<64x128xf32>
    %c0_1 = arith.constant 0 : index
    %c0_2 = arith.constant 0 : index
    %1 = vector.load %arg2[%c0_1, %c0_2] : memref<3x128xf32, #tpu.memory_space<vmem>>, vector<1x128xf32>
    %c1 = arith.constant 1 : index
    %c0_3 = arith.constant 0 : index
    %2 = vector.load %arg2[%c1, %c0_3] : memref<3x128xf32, #tpu.memory_space<vmem>>, vector<1x128xf32>
    %c2 = arith.constant 2 : index
    %c0_4 = arith.constant 0 : index
    %3 = vector.load %arg2[%c2, %c0_4] : memref<3x128xf32, #tpu.memory_space<vmem>>, vector<1x128xf32>
    %4 = vector.broadcast %1 : vector<1x128xf32> to vector<64x128xf32>
    %5 = arith.mulf %0, %4 : vector<64x128xf32>
    %6 = vector.broadcast %2 : vector<1x128xf32> to vector<64x128xf32>
    %7 = arith.addf %5, %6 : vector<64x128xf32>
    %c0_5 = arith.constant 0 : index
    %c0_6 = arith.constant 0 : index
    %8 = vector.load %arg5[%c0_5, %c0_6] : memref<64x128xf32, #tpu.memory_space<vmem>>, vector<64x128xf32>
    tpu.vector_store %arg5[%c0_5, %c0_6], %7 {strides = array<i32>} : memref<64x128xf32, #tpu.memory_space<vmem>>, vector<64x128xf32>,
    %9 = vector.broadcast %3 : vector<1x128xf32> to vector<64x128xf32>
    %10 = arith.addf %5, %9 : vector<64x128xf32>
    %c0_7 = arith.constant 0 : index
    %c0_8 = arith.constant 0 : index
    %11 = vector.load %arg3[%c0_7, %c0_8] : memref<128x8xf32, #tpu.memory_space<vmem>>, vector<128x8xf32>
    %cst = arith.constant dense<0.000000e+00> : vector<64x8xf32>
    %12 = tpu.matmul %10, %11, %cst {dimension_numbers = #tpu.dot_dimension_numbers<[1], [0], [0], [1], [0, 0, 1, 1], [], []>} : vector<64x128xf32>, vector<128x8xf32>, vector<64x8xf32> -> vector<64x8xf32>
    %13 = arith.mulf %10, %10 : vector<64x128xf32>
    %cst_9 = arith.constant dense<0.000000e+00> : vector<64x8xf32>
    %14 = tpu.matmul %13, %11, %cst_9 {dimension_numbers = #tpu.dot_dimension_numbers<[1], [0], [0], [1], [0, 0, 1, 1], [], []>} : vector<64x128xf32>, vector<128x8xf32>, vector<64x8xf32> -> vector<64x8xf32>
    %c0_10 = arith.constant 0 : index
    %15 = memref.load %arg4[%c0_10] : memref<2xf32, #tpu.memory_space<smem>>
    %16 = vector.broadcast %15 : f32 to vector<64x8xf32>
    %17 = arith.subf %16, %14 : vector<64x8xf32>
    %c1_11 = arith.constant 1 : index
    %18 = memref.load %arg4[%c1_11] : memref<2xf32, #tpu.memory_space<smem>>
    %19 = arith.mulf %12, %12 : vector<64x8xf32>
    %20 = vector.broadcast %18 : f32 to vector<64x8xf32>
    %21 = arith.mulf %20, %19 : vector<64x8xf32>
    %22 = arith.addf %17, %21 : vector<64x8xf32>
    %c0_12 = arith.constant 0 : index
    %c0_13 = arith.constant 0 : index
    %23 = vector.load %arg6[%c0_12, %c0_13] : memref<64x8xf32, #tpu.memory_space<vmem>>, vector<64x8xf32>
    tpu.vector_store %arg6[%c0_12, %c0_13], %22 {strides = array<i32>} : memref<64x8xf32, #tpu.memory_space<vmem>>, vector<64x8xf32>,
    return
  }
  func.func @transform_0(%arg0: i32) -> (i32, i32) {
    %c0_i32 = arith.constant 0 : i32
    %c0_i32_0 = arith.constant 0 : i32
    return %arg0, %c0_i32 : i32, i32
  }
  func.func @transform_1(%arg0: i32) -> (i32, i32) {
    %c0_i32 = arith.constant 0 : i32
    %c0_i32_0 = arith.constant 0 : i32
    %c0_i32_1 = arith.constant 0 : i32
    return %c0_i32, %c0_i32_0 : i32, i32
  }
  func.func @transform_2(%arg0: i32) -> (i32, i32) {
    %c0_i32 = arith.constant 0 : i32
    %c0_i32_0 = arith.constant 0 : i32
    %c0_i32_1 = arith.constant 0 : i32
    return %c0_i32, %c0_i32_0 : i32, i32
  }
  func.func @transform_3(%arg0: i32) -> i32 {
    %c0_i32 = arith.constant 0 : i32
    %c0_i32_0 = arith.constant 0 : i32
    return %c0_i32 : i32
  }
  func.func @transform_4(%arg0: i32) -> (i32, i32) {
    %c0_i32 = arith.constant 0 : i32
    %c0_i32_0 = arith.constant 0 : i32
    return %arg0, %c0_i32 : i32, i32
  }
  func.func @transform_5(%arg0: i32) -> (i32, i32) {
    %c0_i32 = arith.constant 0 : i32
    %c0_i32_0 = arith.constant 0 : i32
    return %arg0, %c0_i32 : i32, i32
  }
}

</mosaic_0001>

<llo_original>
// kernel: tpu_custom_call.1
$region0: #{tpu_custom_call.1}
  #allocation0 [shape = 'u32[]', space=smem, size = 0x4, offset = 0x4, fixed_abs, tag = 'smem constant byte address 0x4 - core index']
  #allocation1 [shape = 'u32[144,128]{1,0:T(1,128)}', space=vmem, size = 0x12000, scoped, tag = 'internal scratch']
  %s0 = inlined_call_operand.vmem [shape: f32[64,128], index: 0, kind: input, shape index: {}]
  %s1 = inlined_call_operand.vmem [shape: f32[3,128], index: 1, kind: input, shape index: {}]
  %s2 = inlined_call_operand.vmem [shape: f32[128,8], index: 2, kind: input, shape index: {}]
  %s3 = inlined_call_operand.vmem [shape: f32[2], index: 3, kind: input, shape index: {}]
  %s4 = inlined_call_operand.hbm [shape: f32[64,128], index: 4, kind: output, shape index: {0}]
  %s5 = inlined_call_operand.vmem [shape: f32[64,8], index: 5, kind: output, shape index: {1}]
  %6 = xla_tuple %s4, %s5
  %s7 = sld [smem:[#allocation0]]
  $region38: #{tpu_custom_call.1} parent=0
    _
  %s9 = ssub.s32 1, %s7
  %s10 = scalar_select 0, %s9, %s7
  $region1: #{tpu_custom_call.1} parent=0
    #allocation2 [shape = 'u8[512]{0}', space=smem, size = 0x200, scoped, tag = 'input window, operand 3, single buffered']
    #allocation3 [shape = 's32[1]{0}', space=sflag, size = 0x4, scoped, tag = 'scoped memory for tpu_custom_call.1']
    #allocation4 [shape = 's32[1]{0}', space=sflag, size = 0x4, scoped, tag = 'scoped memory for tpu_custom_call.1']
    #allocation5 [shape = 'u8[32768]{0}', space=vmem, size = 0x8000, scoped, tag = 'output window, operand 0, single buffered']
    %11 = vsyncpa [#allocation4], 0
    %12 = vsyncpa [#allocation3], 0
    // Predicated region
    $region2: #{tpu_custom_call.1} parent=1 // pred_check
      _
    $region3: #{tpu_custom_call.1} parent=1 // pred_check_branch
      %14 = sbr.rel (0) target = $region5
    $region4: #{tpu_custom_call.1} parent=1 // pred_region
      _
    $region5: #{tpu_custom_call.1} parent=1 // pred_fallthru
      _
    // Predicated region
    $region6: #{tpu_custom_call.1} parent=1 // pred_check
      _
    $region7: #{tpu_custom_call.1} parent=1 // pred_check_branch
      %16 = sbr.rel (0) target = $region9
    $region8: #{tpu_custom_call.1} parent=1 // pred_region
      _
    $region9: #{tpu_custom_call.1} parent=1 // pred_fallthru
      _
    // Predicated region
    $region10: #{tpu_custom_call.1} parent=1 // pred_check
      _
    $region11: #{tpu_custom_call.1} parent=1 // pred_check_branch
      %18 = sbr.rel (0) target = $region13
    $region12: #{tpu_custom_call.1} parent=1 // pred_region
      _
    $region13: #{tpu_custom_call.1} parent=1 // pred_fallthru
      _
    // Predicated region
    $region14: #{tpu_custom_call.1} parent=1 // pred_check
      _
    $region15: #{tpu_custom_call.1} parent=1 // pred_check_branch
      %20 = sbr.rel (0) target = $region17
    $region16: #{tpu_custom_call.1} parent=1 // pred_region
      %s22 = ssub.s32 16, 16
      %23 = vsyncadd [#allocation4], %s22
      %s25 = sshll.u32 %s3, 4
      %s26 = int_to_ptr.vmem [resolvable:$true] %s25
      %28 = dma.vmem_to_smem %s26, 16, [#allocation2], [#allocation4]
    $region17: #{tpu_custom_call.1} parent=1 // pred_fallthru
      _
    // Predicated region
    $region18: #{tpu_custom_call.1} parent=1 // pred_check
      _
    $region19: #{tpu_custom_call.1} parent=1 // pred_check_branch
      %30 = sbr.rel (0) target = $region21
    $region20: #{tpu_custom_call.1} parent=1 // pred_region
      %31 = dma.done [#allocation4], 16
    $region21: #{tpu_custom_call.1} parent=1 // pred_fallthru
      _
    %32 = sfence
    %v33 = vld [vmem:[%s0] sm:$0xff]
    %v34 = vld [vmem:[%s0 + $0x8] sm:$0xff]
    %v35 = vld [vmem:[%s0 + $0x10] sm:$0xff]
    %v36 = vld [vmem:[%s0 + $0x18] sm:$0xff]
    %v37 = vld [vmem:[%s0 + $0x20] sm:$0xff]
    %v38 = vld [vmem:[%s0 + $0x28] sm:$0xff]
    %v39 = vld [vmem:[%s0 + $0x30] sm:$0xff]
    %v40 = vld [vmem:[%s0 + $0x38] sm:$0xff]
    %v41 = vld [vmem:[%s1] sm:$0x1]
    %v42 = vld [vmem:[%s1 + $0x1] sm:$0x1]
    %v43 = vld [vmem:[%s1 + $0x2] sm:$0x1]
    %v44 = vlaneseq
    %v45 = vshrl.u32 %v44, 7
    %v46 = vsub.s32 0, %v45
    %v47 = vrot.slane %v41, %v46
    %v48 = vmul.f32 %v33, %v47
    %v49 = vmul.f32 %v34, %v47
    %v50 = vmul.f32 %v35, %v47
    %v51 = vmul.f32 %v36, %v47
    %v52 = vmul.f32 %v37, %v47
    %v53 = vmul.f32 %v38, %v47
    %v54 = vmul.f32 %v39, %v47
    %v55 = vmul.f32 %v40, %v47
    %v56 = vlaneseq
    %v57 = vshrl.u32 %v56, 7
    %v58 = vsub.s32 0, %v57
    %v59 = vrot.slane %v42, %v58
    %v60 = vadd.f32 %v48, %v59
    %v61 = vadd.f32 %v49, %v59
    %v62 = vadd.f32 %v50, %v59
    %v63 = vadd.f32 %v51, %v59
    %v64 = vadd.f32 %v52, %v59
    %v65 = vadd.f32 %v53, %v59
    %v66 = vadd.f32 %v54, %v59
    %v67 = vadd.f32 %v55, %v59
    %68 = vst [vmem:[#allocation5] sm:$0xff] %v60
    %69 = vst [vmem:[#allocation5 + $0x8] sm:$0xff] %v61
    %70 = vst [vmem:[#allocation5 + $0x10] sm:$0xff] %v62
    %71 = vst [vmem:[#allocation5 + $0x18] sm:$0xff] %v63
    %72 = vst [vmem:[#allocation5 + $0x20] sm:$0xff] %v64
    %73 = vst [vmem:[#allocation5 + $0x28] sm:$0xff] %v65
    %74 = vst [vmem:[#allocation5 + $0x30] sm:$0xff] %v66
    %75 = vst [vmem:[#allocation5 + $0x38] sm:$0xff] %v67
    %v76 = vlaneseq
    %v77 = vshrl.u32 %v76, 7
    %v78 = vsub.s32 0, %v77
    %v79 = vrot.slane %v43, %v78
    %v80 = vadd.f32 %v48, %v79
    %v81 = vadd.f32 %v49, %v79
    %v82 = vadd.f32 %v50, %v79
    %v83 = vadd.f32 %v51, %v79
    %v84 = vadd.f32 %v52, %v79
    %v85 = vadd.f32 %v53, %v79
    %v86 = vadd.f32 %v54, %v79
    %v87 = vadd.f32 %v55, %v79
    %v88 = vld [vmem:[%s2] sm:$0xff]
    %v89 = vld [vmem:[%s2 + $0x8] sm:$0xff]
    %v90 = vld [vmem:[%s2 + $0x10] sm:$0xff]
    %v91 = vld [vmem:[%s2 + $0x18] sm:$0xff]
    %v92 = vld [vmem:[%s2 + $0x20] sm:$0xff]
    %v93 = vld [vmem:[%s2 + $0x28] sm:$0xff]
    %v94 = vld [vmem:[%s2 + $0x30] sm:$0xff]
    %v95 = vld [vmem:[%s2 + $0x38] sm:$0xff]
    %v96 = vld [vmem:[%s2 + $0x40] sm:$0xff]
    %v97 = vld [vmem:[%s2 + $0x48] sm:$0xff]
    %v98 = vld [vmem:[%s2 + $0x50] sm:$0xff]
    %v99 = vld [vmem:[%s2 + $0x58] sm:$0xff]
    %v100 = vld [vmem:[%s2 + $0x60] sm:$0xff]
    %v101 = vld [vmem:[%s2 + $0x68] sm:$0xff]
    %v102 = vld [vmem:[%s2 + $0x70] sm:$0xff]
    %v103 = vld [vmem:[%s2 + $0x78] sm:$0xff]
    %104 = vmatprep.subr.mxu0 0.0
    %105 = vmatpush1.msra.mxu0 %v88
    %106 = vmatprep.subr.mxu0 0.0
    %107 = vmatpush1.msra.mxu0 %v89
    %108 = vmatprep.subr.mxu0 0.0
    %109 = vmatpush1.msra.mxu0 %v90
    %110 = vmatprep.subr.mxu0 0.0
    %111 = vmatpush1.msra.mxu0 %v91
    %112 = vmatprep.subr.mxu0 0.0
    %113 = vmatpush1.msra.mxu0 %v92
    %114 = vmatprep.subr.mxu0 0.0
    %115 = vmatpush1.msra.mxu0 %v93
    %116 = vmatprep.subr.mxu0 0.0
    %117 = vmatpush1.msra.mxu0 %v94
    %118 = vmatprep.subr.mxu0 0.0
    %119 = vmatpush1.msra.mxu0 %v95
    %120 = vmatprep.subr.mxu0 0.0
    %121 = vmatpush1.msra.mxu0 %v96
    %122 = vmatprep.subr.mxu0 0.0
    %123 = vmatpush1.msra.mxu0 %v97
    %124 = vmatprep.subr.mxu0 0.0
    %125 = vmatpush1.msra.mxu0 %v98
    %126 = vmatprep.subr.mxu0 0.0
    %127 = vmatpush1.msra.mxu0 %v99
    %128 = vmatprep.subr.mxu0 0.0
    %129 = vmatpush1.msra.mxu0 %v100
    %130 = vmatprep.subr.mxu0 0.0
    %131 = vmatpush1.msra.mxu0 %v101
    %132 = vmatprep.subr.mxu0 0.0
    %133 = vmatpush1.msra.mxu0 %v102
    %134 = vmatprep.subr.mxu0 0.0
    %135 = vmatpush1.msra.mxu0 %v103
    %136 = vmatprep.subr.mxu0 0.0
    %137 = vmatpush1.msra.mxu0 0.0
    %138 = vmatprep.subr.mxu0 0.0
    %139 = vmatpush1.msra.mxu0 0.0
    %140 = vmatprep.subr.mxu0 0.0
    %141 = vmatpush1.msra.mxu0 0.0
    %142 = vmatprep.subr.mxu0 0.0
    %143 = vmatpush1.msra.mxu0 0.0
    %144 = vmatprep.subr.mxu0 0.0
    %145 = vmatpush1.msra.mxu0 0.0
    %146 = vmatprep.subr.mxu0 0.0
    %147 = vmatpush1.msra.mxu0 0.0
    %148 = vmatprep.subr.mxu0 0.0
    %149 = vmatpush1.msra.mxu0 0.0
    %150 = vmatprep.subr.mxu0 0.0
    %151 = vmatpush1.msra.mxu0 0.0
    %152 = vmatprep.subr.mxu0 0.0
    %153 = vmatpush1.msra.mxu0 0.0
    %154 = vmatprep.subr.mxu0 0.0
    %155 = vmatpush1.msra.mxu0 0.0
    %156 = vmatprep.subr.mxu0 0.0
    %157 = vmatpush1.msra.mxu0 0.0
    %158 = vmatprep.subr.mxu0 0.0
    %159 = vmatpush1.msra.mxu0 0.0
    %160 = vmatprep.subr.mxu0 0.0
    %161 = vmatpush1.msra.mxu0 0.0
    %162 = vmatprep.subr.mxu0 0.0
    %163 = vmatpush1.msra.mxu0 0.0
    %164 = vmatprep.subr.mxu0 0.0
    %165 = vmatpush1.msra.mxu0 0.0
    %166 = vmatprep.subr.mxu0 0.0
    %167 = vmatpush1.msra.mxu0 0.0
    %168 = vmatprep.mubr.f32.mxu0 0.0
    %169 = vmatmul.mubr.f32.gmra.mrb[0].mxu0 %v80
    %v170 = vpop.f32.mrb[0].mxu0
    %v171 = vadd.f32 0.0, %v170
    %v172 = vpop.f32.mrb[0].mxu0
    %173 = vmatprep.mubr.f32.mxu0 0.0
    %174 = vmatmul.mubr.f32.gmra.mrb[0].mxu0 %v81
    %v175 = vpop.f32.mrb[0].mxu0
    %v176 = vadd.f32 0.0, %v175
    %v177 = vpop.f32.mrb[0].mxu0
    %178 = vmatprep.mubr.f32.mxu0 0.0
    %179 = vmatmul.mubr.f32.gmra.mrb[0].mxu0 %v82
    %v180 = vpop.f32.mrb[0].mxu0
    %v181 = vadd.f32 0.0, %v180
    %v182 = vpop.f32.mrb[0].mxu0
    %183 = vmatprep.mubr.f32.mxu0 0.0
    %184 = vmatmul.mubr.f32.gmra.mrb[0].mxu0 %v83
    %v185 = vpop.f32.mrb[0].mxu0
    %v186 = vadd.f32 0.0, %v185
    %v187 = vpop.f32.mrb[0].mxu0
    %188 = vmatprep.mubr.f32.mxu0 0.0
    %189 = vmatmul.mubr.f32.gmra.mrb[0].mxu0 %v84
    %v190 = vpop.f32.mrb[0].mxu0
    %v191 = vadd.f32 0.0, %v190
    %v192 = vpop.f32.mrb[0].mxu0
    %193 = vmatprep.mubr.f32.mxu0 0.0
    %194 = vmatmul.mubr.f32.gmra.mrb[0].mxu0 %v85
    %v195 = vpop.f32.mrb[0].mxu0
    %v196 = vadd.f32 0.0, %v195
    %v197 = vpop.f32.mrb[0].mxu0
    %198 = vmatprep.mubr.f32.mxu0 0.0
    %199 = vmatmul.mubr.f32.gmra.mrb[0].mxu0 %v86
    %v200 = vpop.f32.mrb[0].mxu0
    %v201 = vadd.f32 0.0, %v200
    %v202 = vpop.f32.mrb[0].mxu0
    %203 = vmatprep.mubr.f32.mxu0 0.0
    %204 = vmatmul.mubr.f32.gmra.mrb[0].mxu0 %v87
    %v205 = vpop.f32.mrb[0].mxu0
    %v206 = vadd.f32 0.0, %v205
    %v207 = vpop.f32.mrb[0].mxu0
    %208 = vdwg.mxu0
    %v209 = vmul.f32 %v80, %v80
    %v210 = vmul.f32 %v81, %v81
    %v211 = vmul.f32 %v82, %v82
    %v212 = vmul.f32 %v83, %v83
    %v213 = vmul.f32 %v84, %v84
    %v214 = vmul.f32 %v85, %v85
    %v215 = vmul.f32 %v86, %v86
    %v216 = vmul.f32 %v87, %v87
    %217 = vmatprep.subr.mxu0 0.0
    %218 = vmatpush1.msra.mxu0 %v88
    %219 = vmatprep.subr.mxu0 0.0
    %220 = vmatpush1.msra.mxu0 %v89
    %221 = vmatprep.subr.mxu0 0.0
    %222 = vmatpush1.msra.mxu0 %v90
    %223 = vmatprep.subr.mxu0 0.0
    %224 = vmatpush1.msra.mxu0 %v91
    %225 = vmatprep.subr.mxu0 0.0
    %226 = vmatpush1.msra.mxu0 %v92
    %227 = vmatprep.subr.mxu0 0.0
    %228 = vmatpush1.msra.mxu0 %v93
    %229 = vmatprep.subr.mxu0 0.0
    %230 = vmatpush1.msra.mxu0 %v94
    %231 = vmatprep.subr.mxu0 0.0
    %232 = vmatpush1.msra.mxu0 %v95
    %233 = vmatprep.subr.mxu0 0.0
    %234 = vmatpush1.msra.mxu0 %v96
    %235 = vmatprep.subr.mxu0 0.0
    %236 = vmatpush1.msra.mxu0 %v97
    %237 = vmatprep.subr.mxu0 0.0
    %238 = vmatpush1.msra.mxu0 %v98
    %239 = vmatprep.subr.mxu0 0.0
    %240 = vmatpush1.msra.mxu0 %v99
    %241 = vmatprep.subr.mxu0 0.0
    %242 = vmatpush1.msra.mxu0 %v100
    %243 = vmatprep.subr.mxu0 0.0
    %244 = vmatpush1.msra.mxu0 %v101
    %245 = vmatprep.subr.mxu0 0.0
    %246 = vmatpush1.msra.mxu0 %v102
    %247 = vmatprep.subr.mxu0 0.0
    %248 = vmatpush1.msra.mxu0 %v103
    %249 = vmatprep.subr.mxu0 0.0
    %250 = vmatpush1.msra.mxu0 0.0
    %251 = vmatprep.subr.mxu0 0.0
    %252 = vmatpush1.msra.mxu0 0.0
    %253 = vmatprep.subr.mxu0 0.0
    %254 = vmatpush1.msra.mxu0 0.0
    %255 = vmatprep.subr.mxu0 0.0
    %256 = vmatpush1.msra.mxu0 0.0
    %257 = vmatprep.subr.mxu0 0.0
    %258 = vmatpush1.msra.mxu0 0.0
    %259 = vmatprep.subr.mxu0 0.0
    %260 = vmatpush1.msra.mxu0 0.0
    %261 = vmatprep.subr.mxu0 0.0
    %262 = vmatpush1.msra.mxu0 0.0
    %263 = vmatprep.subr.mxu0 0.0
    %264 = vmatpush1.msra.mxu0 0.0
    %265 = vmatprep.subr.mxu0 0.0
    %266 = vmatpush1.msra.mxu0 0.0
    %267 = vmatprep.subr.mxu0 0.0
    %268 = vmatpush1.msra.mxu0 0.0
    %269 = vmatprep.subr.mxu0 0.0
    %270 = vmatpush1.msra.mxu0 0.0
    %271 = vmatprep.subr.mxu0 0.0
    %272 = vmatpush1.msra.mxu0 0.0
    %273 = vmatprep.subr.mxu0 0.0
    %274 = vmatpush1.msra.mxu0 0.0
    %275 = vmatprep.subr.mxu0 0.0
    %276 = vmatpush1.msra.mxu0 0.0
    %277 = vmatprep.subr.mxu0 0.0
    %278 = vmatpush1.msra.mxu0 0.0
    %279 = vmatprep.subr.mxu0 0.0
    %280 = vmatpush1.msra.mxu0 0.0
    %281 = vmatprep.mubr.f32.mxu0 0.0
    %282 = vmatmul.mubr.f32.gmra.mrb[0].mxu0 %v209
    %v283 = vpop.f32.mrb[0].mxu0
    %v284 = vadd.f32 0.0, %v283
    %v285 = vpop.f32.mrb[0].mxu0
    %286 = vmatprep.mubr.f32.mxu0 0.0
    %287 = vmatmul.mubr.f32.gmra.mrb[0].mxu0 %v210
    %v288 = vpop.f32.mrb[0].mxu0
    %v289 = vadd.f32 0.0, %v288
    %v290 = vpop.f32.mrb[0].mxu0
    %291 = vmatprep.mubr.f32.mxu0 0.0
    %292 = vmatmul.mubr.f32.gmra.mrb[0].mxu0 %v211
    %v293 = vpop.f32.mrb[0].mxu0
    %v294 = vadd.f32 0.0, %v293
    %v295 = vpop.f32.mrb[0].mxu0
    %296 = vmatprep.mubr.f32.mxu0 0.0
    %297 = vmatmul.mubr.f32.gmra.mrb[0].mxu0 %v212
    %v298 = vpop.f32.mrb[0].mxu0
    %v299 = vadd.f32 0.0, %v298
    %v300 = vpop.f32.mrb[0].mxu0
    %301 = vmatprep.mubr.f32.mxu0 0.0
    %302 = vmatmul.mubr.f32.gmra.mrb[0].mxu0 %v213
    %v303 = vpop.f32.mrb[0].mxu0
    %v304 = vadd.f32 0.0, %v303
    %v305 = vpop.f32.mrb[0].mxu0
    %306 = vmatprep.mubr.f32.mxu0 0.0
    %307 = vmatmul.mubr.f32.gmra.mrb[0].mxu0 %v214
    %v308 = vpop.f32.mrb[0].mxu0
    %v309 = vadd.f32 0.0, %v308
    %v310 = vpop.f32.mrb[0].mxu0
    %311 = vmatprep.mubr.f32.mxu0 0.0
    %312 = vmatmul.mubr.f32.gmra.mrb[0].mxu0 %v215
    %v313 = vpop.f32.mrb[0].mxu0
    %v314 = vadd.f32 0.0, %v313
    %v315 = vpop.f32.mrb[0].mxu0
    %316 = vmatprep.mubr.f32.mxu0 0.0
    %317 = vmatmul.mubr.f32.gmra.mrb[0].mxu0 %v216
    %v318 = vpop.f32.mrb[0].mxu0
    %v319 = vadd.f32 0.0, %v318
    %v320 = vpop.f32.mrb[0].mxu0
    %321 = vdwg.mxu0
    %s322 = sld [smem:[#allocation2]]
    %v323 = vstv %s322
    %v324 = vsub.f32 %v323, %v284
    %v325 = vsub.f32 %v323, %v289
    %v326 = vsub.f32 %v323, %v294
    %v327 = vsub.f32 %v323, %v299
    %v328 = vsub.f32 %v323, %v304
    %v329 = vsub.f32 %v323, %v309
    %v330 = vsub.f32 %v323, %v314
    %v331 = vsub.f32 %v323, %v319
    %s332 = sld [smem:[#allocation2 + $0x1]]
    %v333 = vmul.f32 %v171, %v171
    %v334 = vmul.f32 %v176, %v176
    %v335 = vmul.f32 %v181, %v181
    %v336 = vmul.f32 %v186, %v186
    %v337 = vmul.f32 %v191, %v191
    %v338 = vmul.f32 %v196, %v196
    %v339 = vmul.f32 %v201, %v201
    %v340 = vmul.f32 %v206, %v206
    %v341 = vstv %s332
    %v342 = vmul.f32 %v341, %v333
    %v343 = vmul.f32 %v341, %v334
    %v344 = vmul.f32 %v341, %v335
    %v345 = vmul.f32 %v341, %v336
    %v346 = vmul.f32 %v341, %v337
    %v347 = vmul.f32 %v341, %v338
    %v348 = vmul.f32 %v341, %v339
    %v349 = vmul.f32 %v341, %v340
    %v350 = vadd.f32 %v324, %v342
    %v351 = vadd.f32 %v325, %v343
    %v352 = vadd.f32 %v326, %v344
    %v353 = vadd.f32 %v327, %v345
    %v354 = vadd.f32 %v328, %v346
    %v355 = vadd.f32 %v329, %v347
    %v356 = vadd.f32 %v330, %v348
    %v357 = vadd.f32 %v331, %v349
    %vm358 = vcmask 64512
    %359 = vst.msk [vmem:[%s5] sm:$0xff] %vm358, %v350
    %360 = vst.msk [vmem:[%s5 + $0x8] sm:$0xff] %vm358, %v351
    %361 = vst.msk [vmem:[%s5 + $0x10] sm:$0xff] %vm358, %v352
    %362 = vst.msk [vmem:[%s5 + $0x18] sm:$0xff] %vm358, %v353
    %363 = vst.msk [vmem:[%s5 + $0x20] sm:$0xff] %vm358, %v354
    %364 = vst.msk [vmem:[%s5 + $0x28] sm:$0xff] %vm358, %v355
    %365 = vst.msk [vmem:[%s5 + $0x30] sm:$0xff] %vm358, %v356
    %366 = vst.msk [vmem:[%s5 + $0x38] sm:$0xff] %vm358, %v357
    // Predicated region
    $region22: #{tpu_custom_call.1} parent=1 // pred_check
      _
    $region23: #{tpu_custom_call.1} parent=1 // pred_check_branch
      %368 = sbr.rel (0) target = $region25
    $region24: #{tpu_custom_call.1} parent=1 // pred_region
      %s370 = ssub.s32 1024, 1024
      %371 = vsyncadd [#allocation3], %s370
      %s372 = sshll.u32 [#allocation5], 4
      %s373 = int_to_ptr.vmem [resolvable:$true] %s372
      %378 = dma.vmem_to_hbm [thread:$0]  %s373, 1024, %s4, [#allocation3], 128, 128, 8
    $region25: #{tpu_custom_call.1} parent=1 // pred_fallthru
      _
    // Predicated region
    $region26: #{tpu_custom_call.1} parent=1 // pred_check
      _
    $region27: #{tpu_custom_call.1} parent=1 // pred_check_branch
      %380 = sbr.rel (0) target = $region29
    $region28: #{tpu_custom_call.1} parent=1 // pred_region
      _
    $region29: #{tpu_custom_call.1} parent=1 // pred_fallthru
      _
    // Predicated region
    $region30: #{tpu_custom_call.1} parent=1 // pred_check
      _
    $region31: #{tpu_custom_call.1} parent=1 // pred_check_branch
      %382 = sbr.rel (0) target = $region33
    $region32: #{tpu_custom_call.1} parent=1 // pred_region
      %383 = dma.done [#allocation3], 1024
    $region33: #{tpu_custom_call.1} parent=1 // pred_fallthru
      _
    // Predicated region
    $region34: #{tpu_custom_call.1} parent=1 // pred_check
      _
    $region35: #{tpu_custom_call.1} parent=1 // pred_check_branch
      %385 = sbr.rel (0) target = $region37
    $region36: #{tpu_custom_call.1} parent=1 // pred_region
      _
    $region37: #{tpu_custom_call.1} parent=1 // pred_fallthru
      _
    %386 = vsyncpa [#allocation3], 1
    %387 = vsyncpa [#allocation4], 1

</llo_original>
